<compile_context>
chip_gen: v7x
topology: tpu7x:2x2x1
jax: 0.10.0
libtpu: 0.0.40
codegen_flags: <defaults>
</compile_context>

<pallas_src>
import jax
import jax.numpy as jnp
from jax.experimental import pallas as pl
from jax.experimental.pallas import tpu as pltpu


def _main_kernel(xs_ref, inv_std_ref, shift_ref, dps_ref, w_ref, b_ref, dlog_ref,
                 adv_ref, clean_ref, fadv_ref, fclean_ref, acc_ref):
    """One (batch-tile, D-tile) step: normalize, write features, accumulate fc."""
    k = pl.program_id(1)

    # Normalize folded into a single mul+add; dps (= clip(dp)/std) is a
    # precomputed grid-invariant input.
    feat_clean = xs_ref[...] * inv_std_ref[...] + shift_ref[...]   # (TB, TD)
    fclean_ref[...] = feat_clean                                   # hook: feat(xs)
    fadv_ref[...] = feat_clean + dps_ref[...]                      # hook: feat(xs+dp)

    @pl.when(k == 0)
    def _():
        acc_ref[...] = jnp.zeros_like(acc_ref)

    # fc head partial product for this D tile (MXU).
    acc_ref[...] += jnp.dot(feat_clean, w_ref[...],
                            preferred_element_type=jnp.float32)

    @pl.when(k == pl.num_programs(1) - 1)
    def _():
        clean_logits = acc_ref[...] + b_ref[...]
        clean_ref[...] = clean_logits
        # adv logits via linearity: (feat_clean + dps) @ W + b
        #                         = clean_logits + (dps @ W)   (dps@W precomputed)
        adv_ref[...] = clean_logits + dlog_ref[...]


def _round_up(x, m):
    return ((x + m - 1) // m) * m


def dp_forward(xs, dp, mean, std, fc_w, fc_b, epsilon):
    """xs: (B, C, H, W) float32.  dp: (1, C, H, W).  mean/std: (C,).
    fc_w: (C*H*W, K).  fc_b: (K,).  Returns (adv_logits, clean_logits,
    pattern_logits, hidden) mirroring DP.forward."""
    B, C, H, W = xs.shape
    D = C * H * W
    K = fc_w.shape[1]
    KP = _round_up(K, 128)                      # lane-dense logits
    f32 = jnp.float32

    # ---- wrapper glue: flatten NCHW -> lane-dense (rows, D), fold stats ----
    xs_flat = xs.reshape(B, D).astype(f32)
    dp_flat = dp.reshape(1, D).astype(f32)
    inv_std_flat = jnp.broadcast_to((1.0 / std).astype(f32).reshape(C, 1, 1),
                                    (C, H, W)).reshape(1, D)
    shift_flat = jnp.broadcast_to((-mean / std).astype(f32).reshape(C, 1, 1),
                                  (C, H, W)).reshape(1, D)

    # ---- grid-invariant dp work hoisted out of the kernel ----
    dp_c = jnp.clip(dp_flat, -float(epsilon), float(epsilon))  # clamp(dp)
    dps = dp_c * inv_std_flat                                  # clip(dp)/std, (1, D)
    feat_pat = dps + shift_flat                                # fc input of tarNet(dp)
    # One tiny (2, D) @ (D, K) matmul gives both dps@W and the pattern logits
    # (single W read in XLA; no second pallas_call re-streaming W).
    small_logits = jnp.concatenate([dps, feat_pat], axis=0) @ fc_w.astype(f32)
    pat_logits = small_logits[1:2] + fc_b.astype(f32)          # (1, K)
    dps_logits = jnp.zeros((1, KP), f32).at[:, :K].set(small_logits[0:1])

    w_pad = jnp.zeros((D, KP), f32).at[:, :K].set(fc_w.astype(f32))
    b_pad = jnp.zeros((1, KP), f32).at[0, :K].set(fc_b.astype(f32))

    # ---- per-generation VMEM budget ----
    vmem_cap = 64 * 1024 * 1024                # safe lower bound (v7x per-TC)
    try:
        vmem_cap = int(pltpu.get_tpu_info().vmem_capacity_bytes)
    except Exception:
        pass
    vmem_limit = min(int(vmem_cap * 0.75), 100 * 1024 * 1024)  # ~48M v7x, ~96M v5e/v6e
    budget = int(vmem_limit * 0.85)

    def vmem_bytes(tb, td):
        # double-buffered pipeline buffers + f32 accumulator scratch
        per_step = (tb * td                    # xs
                    + 3 * td                   # inv_std, shift, dps
                    + td * KP + 2 * KP         # W tile, b, dps@W
                    + 2 * tb * KP              # adv, clean logits
                    + 2 * tb * td)             # feat(xs+dp), feat(xs)
        return 4 * (2 * per_step + tb * KP)

    # ---- contraction (D) tiling only when W + tiles cannot be resident ----
    D_pad, TD = D, D
    if vmem_bytes(8, D) > budget:
        D_pad = _round_up(D, 128)
        TD = 128
        for t in range(D_pad, 127, -128):
            if D_pad % t == 0 and vmem_bytes(8, t) <= budget:
                TD = t
                break
    if D_pad != D:
        pad_d = D_pad - D
        xs_flat = jnp.pad(xs_flat, ((0, 0), (0, pad_d)))
        inv_std_flat = jnp.pad(inv_std_flat, ((0, 0), (0, pad_d)))
        shift_flat = jnp.pad(shift_flat, ((0, 0), (0, pad_d)))
        dps = jnp.pad(dps, ((0, 0), (0, pad_d)))
        w_pad = jnp.pad(w_pad, ((0, pad_d), (0, 0)))

    # ---- VMEM-aware batch tile ----
    B8 = _round_up(B, 8)
    const_bytes = 8 * (3 * TD + TD * KP + 2 * KP)
    row_bytes = 4 * (6 * TD + 5 * KP)
    avail = max(budget - const_bytes, 8 * row_bytes)
    TB = max(8, min(1024, (avail // row_bytes) // 8 * 8))
    TB = min(TB, B8)
    if B8 >= 16:                               # >=2 batch steps so v7x uses both TCs
        TB = min(TB, max(8, _round_up(B8 // 2, 8)))
    # prefer a TB that divides B8 (avoids the full-array pad copy of xs)
    best_div = 8
    for t in range(TB, 7, -8):
        if B8 % t == 0:
            best_div = t
            break
    if best_div * 2 >= TB:
        TB = best_div
    B_pad = _round_up(B8, TB)
    if B_pad != B:
        xs_flat = jnp.pad(xs_flat, ((0, B_pad - B), (0, 0)))

    grid = (B_pad // TB, D_pad // TD)

    row_spec = pl.BlockSpec((TB, TD), lambda i, k: (i, k))      # batch x D tiles
    stat_spec = pl.BlockSpec((1, TD), lambda i, k: (0, k))      # inv_std / shift / dps
    w_spec = pl.BlockSpec((TD, KP), lambda i, k: (k, 0))        # streamed W tiles
    vec_spec = pl.BlockSpec((1, KP), lambda i, k: (0, 0))       # b, dps@W (constant)
    logit_spec = pl.BlockSpec((TB, KP), lambda i, k: (i, 0))    # resident over k

    out_shapes = (
        jax.ShapeDtypeStruct((B_pad, KP), f32),     # logits(xs + dp)
        jax.ShapeDtypeStruct((B_pad, KP), f32),     # logits(xs)
        jax.ShapeDtypeStruct((B_pad, D_pad), f32),  # hidden feat(xs + dp)
        jax.ShapeDtypeStruct((B_pad, D_pad), f32),  # hidden feat(xs)
    )

    adv_p, clean_p, fadv_p, fclean_p = pl.pallas_call(
        _main_kernel,
        out_shape=out_shapes,
        grid=grid,
        in_specs=[row_spec, stat_spec, stat_spec, stat_spec,
                  w_spec, vec_spec, vec_spec],
        out_specs=[logit_spec, logit_spec, row_spec, row_spec],
        scratch_shapes=[pltpu.VMEM((TB, KP), f32)],
        compiler_params=pltpu.CompilerParams(
            dimension_semantics=("parallel", "arbitrary"),
            vmem_limit_bytes=vmem_limit),
    )(xs_flat, inv_std_flat, shift_flat, dps, w_pad, b_pad, dps_logits)

    adv = adv_p[:B, :K]
    clean = clean_p[:B, :K]
    hidden = [fadv_p[:B, :D], fclean_p[:B, :D], feat_pat]
    return adv, clean, pat_logits, hidden


def reference_forward(xs, dp, mean, std, fc_w, fc_b, epsilon):
    """Plain-JAX reference for correctness checking."""
    B, C, H, W = xs.shape
    dp_c = jnp.clip(dp, -epsilon, epsilon)
    m = mean.reshape(1, C, 1, 1)
    s = std.reshape(1, C, 1, 1)

    def net(x):
        feat = ((x - m) / s).reshape(x.shape[0], -1)
        return feat @ fc_w + fc_b, feat

    adv, f_adv = net(xs + dp_c)
    clean, f_clean = net(xs)
    pat, f_pat = net(dp_c)
    return adv, clean, pat, [f_adv, f_clean, f_pat]


if __name__ == "__main__":
    # small, forward-consistent shapes
    B, C, H, W = 2, 4, 16, 16          # img_size = (C, H, W)
    K = 8                              # num classes of the fc head
    epsilon = 0.1

    key = jax.random.PRNGKey(0)
    k_xs, k_dp, k_w, k_b = jax.random.split(key, 4)

    xs = jax.random.uniform(k_xs, (B, C, H, W), dtype=jnp.float32)
    # DP.__init__ sets dp to zeros; use a small random pattern so the clamp
    # and perturbation paths are exercised (deterministic, in-script).
    dp = 0.3 * jax.random.normal(k_dp, (1, C, H, W), dtype=jnp.float32)

    # deterministic Normalize stats (per channel) and fc parameters
    mean = jnp.array([0.485, 0.456, 0.406, 0.5], dtype=jnp.float32)[:C]
    std = jnp.array([0.229, 0.224, 0.225, 0.25], dtype=jnp.float32)[:C]
    D = C * H * W
    fc_w = 0.02 * jax.random.normal(k_w, (D, K), dtype=jnp.float32)
    fc_b = 0.01 * jax.random.normal(k_b, (K,), dtype=jnp.float32)

    # TODO(synk): the pretrained torchvision backbone (resnet/vgg conv stacks,
    # checkpoint loading) is not translated; the Normalize + fc-head core is.

    adv, clean, pat, hidden = dp_forward(xs, dp, mean, std, fc_w, fc_b, epsilon)
    jax.block_until_ready((adv, clean, pat, hidden))

    # correctness check against plain-JAX reference
    r_adv, r_clean, r_pat, r_hidden = reference_forward(
        xs, dp, mean, std, fc_w, fc_b, epsilon)
    assert jnp.allclose(adv, r_adv, atol=1e-4, rtol=1e-4)
    assert jnp.allclose(clean, r_clean, atol=1e-4, rtol=1e-4)
    assert jnp.allclose(pat, r_pat, atol=1e-4, rtol=1e-4)
    for h, rh in zip(hidden, r_hidden):
        assert jnp.allclose(h, rh, atol=1e-4, rtol=1e-4)

    print("KERNEL_OK")
</pallas_src>

<mosaic_0001>
module attributes {stable_mosaic.version = 11 : i64} {
  func.func @_main_kernel(%arg0: i32, %arg1: i32, %arg2: memref<8x1024xf32, #tpu.memory_space<vmem>>, %arg3: memref<1x1024xf32, #tpu.memory_space<vmem>>, %arg4: memref<1x1024xf32, #tpu.memory_space<vmem>>, %arg5: memref<1x1024xf32, #tpu.memory_space<vmem>>, %arg6: memref<1024x128xf32, #tpu.memory_space<vmem>>, %arg7: memref<1x128xf32, #tpu.memory_space<vmem>>, %arg8: memref<1x128xf32, #tpu.memory_space<vmem>>, %arg9: memref<8x128xf32, #tpu.memory_space<vmem>>, %arg10: memref<8x128xf32, #tpu.memory_space<vmem>>, %arg11: memref<8x1024xf32, #tpu.memory_space<vmem>>, %arg12: memref<8x1024xf32, #tpu.memory_space<vmem>>, %arg13: memref<8x128xf32, #tpu.memory_space<vmem>>) attributes {dimension_semantics = [#tpu.dimension_semantics<parallel>, #tpu.dimension_semantics<arbitrary>], iteration_bounds = array<i64: 1, 1>, scalar_prefetch = 0 : i64, scratch_operands = 1 : i64, tpu.core_type = #tpu.core_type<tc>, window_params = [{transform_indices = @transform_0, window_bounds = array<i64: 8, 1024>}, {transform_indices = @transform_1, window_bounds = array<i64: 1, 1024>}, {transform_indices = @transform_2, window_bounds = array<i64: 1, 1024>}, {transform_indices = @transform_3, window_bounds = array<i64: 1, 1024>}, {transform_indices = @transform_4, window_bounds = array<i64: 1024, 128>}, {pipeline_mode = #tpu.pipeline_mode<synchronous>, transform_indices = @transform_5, window_bounds = array<i64: 1, 128>}, {pipeline_mode = #tpu.pipeline_mode<synchronous>, transform_indices = @transform_6, window_bounds = array<i64: 1, 128>}, {transform_indices = @transform_7, window_bounds = array<i64: 8, 128>}, {transform_indices = @transform_8, window_bounds = array<i64: 8, 128>}, {transform_indices = @transform_9, window_bounds = array<i64: 8, 1024>}, {transform_indices = @transform_10, window_bounds = array<i64: 8, 1024>}]} {
    %c0 = arith.constant 0 : index
    %c0_0 = arith.constant 0 : index
    %0 = vector.load %arg2[%c0, %c0_0] : memref<8x1024xf32, #tpu.memory_space<vmem>>, vector<8x1024xf32>
    %c0_1 = arith.constant 0 : index
    %c0_2 = arith.constant 0 : index
    %1 = vector.load %arg3[%c0_1, %c0_2] : memref<1x1024xf32, #tpu.memory_space<vmem>>, vector<1x1024xf32>
    %2 = vector.broadcast %1 : vector<1x1024xf32> to vector<8x1024xf32>
    %3 = arith.mulf %0, %2 : vector<8x1024xf32>
    %c0_3 = arith.constant 0 : index
    %c0_4 = arith.constant 0 : index
    %4 = vector.load %arg4[%c0_3, %c0_4] : memref<1x1024xf32, #tpu.memory_space<vmem>>, vector<1x1024xf32>
    %5 = vector.broadcast %4 : vector<1x1024xf32> to vector<8x1024xf32>
    %6 = arith.addf %3, %5 : vector<8x1024xf32>
    %c0_5 = arith.constant 0 : index
    %c0_6 = arith.constant 0 : index
    %7 = vector.load %arg12[%c0_5, %c0_6] : memref<8x1024xf32, #tpu.memory_space<vmem>>, vector<8x1024xf32>
    tpu.vector_store %arg12[%c0_5, %c0_6], %6 {strides = array<i32>} : memref<8x1024xf32, #tpu.memory_space<vmem>>, vector<8x1024xf32>,
    %c0_7 = arith.constant 0 : index
    %c0_8 = arith.constant 0 : index
    %8 = vector.load %arg5[%c0_7, %c0_8] : memref<1x1024xf32, #tpu.memory_space<vmem>>, vector<1x1024xf32>
    %9 = vector.broadcast %8 : vector<1x1024xf32> to vector<8x1024xf32>
    %10 = arith.addf %6, %9 : vector<8x1024xf32>
    %c0_9 = arith.constant 0 : index
    %c0_10 = arith.constant 0 : index
    %11 = vector.load %arg11[%c0_9, %c0_10] : memref<8x1024xf32, #tpu.memory_space<vmem>>, vector<8x1024xf32>
    tpu.vector_store %arg11[%c0_9, %c0_10], %10 {strides = array<i32>} : memref<8x1024xf32, #tpu.memory_space<vmem>>, vector<8x1024xf32>,
    %c0_i32 = arith.constant 0 : i32
    %12 = arith.cmpi eq, %arg1, %c0_i32 : i32
    %13 = arith.extui %12 : i1 to i32
    %c0_i32_11 = arith.constant 0 : i32
    %14 = arith.cmpi ne, %13, %c0_i32_11 : i32
    scf.if %14 {
      %cst_20 = arith.constant 0.000000e+00 : f32
      %23 = vector.broadcast %cst_20 : f32 to vector<8x128xf32>
      %c0_21 = arith.constant 0 : index
      %c0_22 = arith.constant 0 : index
      %24 = vector.load %arg13[%c0_21, %c0_22] : memref<8x128xf32, #tpu.memory_space<vmem>>, vector<8x128xf32>
      tpu.vector_store %arg13[%c0_21, %c0_22], %23 {strides = array<i32>} : memref<8x128xf32, #tpu.memory_space<vmem>>, vector<8x128xf32>,
    } else {
    }
    %c0_12 = arith.constant 0 : index
    %c0_13 = arith.constant 0 : index
    %15 = vector.load %arg13[%c0_12, %c0_13] : memref<8x128xf32, #tpu.memory_space<vmem>>, vector<8x128xf32>
    %c0_14 = arith.constant 0 : index
    %c0_15 = arith.constant 0 : index
    %16 = vector.load %arg6[%c0_14, %c0_15] : memref<1024x128xf32, #tpu.memory_space<vmem>>, vector<1024x128xf32>
    %cst = arith.constant dense<0.000000e+00> : vector<8x128xf32>
    %17 = tpu.matmul %6, %16, %cst {dimension_numbers = #tpu.dot_dimension_numbers<[1], [0], [0], [1], [0, 0, 1, 1], [], []>} : vector<8x1024xf32>, vector<1024x128xf32>, vector<8x128xf32> -> vector<8x128xf32>
    %18 = arith.addf %15, %17 : vector<8x128xf32>
    %c0_16 = arith.constant 0 : index
    %c0_17 = arith.constant 0 : index
    %19 = vector.load %arg13[%c0_16, %c0_17] : memref<8x128xf32, #tpu.memory_space<vmem>>, vector<8x128xf32>
    tpu.vector_store %arg13[%c0_16, %c0_17], %18 {strides = array<i32>} : memref<8x128xf32, #tpu.memory_space<vmem>>, vector<8x128xf32>,
    %c0_i32_18 = arith.constant 0 : i32
    %20 = arith.cmpi eq, %arg1, %c0_i32_18 : i32
    %21 = arith.extui %20 : i1 to i32
    %c0_i32_19 = arith.constant 0 : i32
    %22 = arith.cmpi ne, %21, %c0_i32_19 : i32
    scf.if %22 {
      %c0_20 = arith.constant 0 : index
      %c0_21 = arith.constant 0 : index
      %23 = vector.load %arg13[%c0_20, %c0_21] : memref<8x128xf32, #tpu.memory_space<vmem>>, vector<8x128xf32>
      %c0_22 = arith.constant 0 : index
      %c0_23 = arith.constant 0 : index
      %24 = vector.load %arg7[%c0_22, %c0_23] : memref<1x128xf32, #tpu.memory_space<vmem>>, vector<1x128xf32>
      %25 = vector.broadcast %24 : vector<1x128xf32> to vector<8x128xf32>
      %26 = arith.addf %23, %25 : vector<8x128xf32>
      %c0_24 = arith.constant 0 : index
      %c0_25 = arith.constant 0 : index
      %27 = vector.load %arg10[%c0_24, %c0_25] : memref<8x128xf32, #tpu.memory_space<vmem>>, vector<8x128xf32>
      tpu.vector_store %arg10[%c0_24, %c0_25], %26 {strides = array<i32>} : memref<8x128xf32, #tpu.memory_space<vmem>>, vector<8x128xf32>,
      %c0_26 = arith.constant 0 : index
      %c0_27 = arith.constant 0 : index
      %28 = vector.load %arg8[%c0_26, %c0_27] : memref<1x128xf32, #tpu.memory_space<vmem>>, vector<1x128xf32>
      %29 = vector.broadcast %28 : vector<1x128xf32> to vector<8x128xf32>
      %30 = arith.addf %26, %29 : vector<8x128xf32>
      %c0_28 = arith.constant 0 : index
      %c0_29 = arith.constant 0 : index
      %31 = vector.load %arg9[%c0_28, %c0_29] : memref<8x128xf32, #tpu.memory_space<vmem>>, vector<8x128xf32>
      tpu.vector_store %arg9[%c0_28, %c0_29], %30 {strides = array<i32>} : memref<8x128xf32, #tpu.memory_space<vmem>>, vector<8x128xf32>,
    } else {
    }
    return
  }
  func.func @transform_0(%arg0: i32, %arg1: i32) -> (i32, i32) {
    %c0_i32 = arith.constant 0 : i32
    return %arg0, %arg1 : i32, i32
  }
  func.func @transform_1(%arg0: i32, %arg1: i32) -> (i32, i32) {
    %c0_i32 = arith.constant 0 : i32
    %c0_i32_0 = arith.constant 0 : i32
    return %c0_i32, %arg1 : i32, i32
  }
  func.func @transform_2(%arg0: i32, %arg1: i32) -> (i32, i32) {
    %c0_i32 = arith.constant 0 : i32
    %c0_i32_0 = arith.constant 0 : i32
    return %c0_i32, %arg1 : i32, i32
  }
  func.func @transform_3(%arg0: i32, %arg1: i32) -> (i32, i32) {
    %c0_i32 = arith.constant 0 : i32
    %c0_i32_0 = arith.constant 0 : i32
    return %c0_i32, %arg1 : i32, i32
  }
  func.func @transform_4(%arg0: i32, %arg1: i32) -> (i32, i32) {
    %c0_i32 = arith.constant 0 : i32
    %c0_i32_0 = arith.constant 0 : i32
    return %arg1, %c0_i32 : i32, i32
  }
  func.func @transform_5(%arg0: i32, %arg1: i32) -> (i32, i32) {
    %c0_i32 = arith.constant 0 : i32
    %c0_i32_0 = arith.constant 0 : i32
    %c0_i32_1 = arith.constant 0 : i32
    return %c0_i32, %c0_i32_0 : i32, i32
  }
  func.func @transform_6(%arg0: i32, %arg1: i32) -> (i32, i32) {
    %c0_i32 = arith.constant 0 : i32
    %c0_i32_0 = arith.constant 0 : i32
    %c0_i32_1 = arith.constant 0 : i32
    return %c0_i32, %c0_i32_0 : i32, i32
  }
  func.func @transform_7(%arg0: i32, %arg1: i32) -> (i32, i32) {
    %c0_i32 = arith.constant 0 : i32
    %c0_i32_0 = arith.constant 0 : i32
    return %arg0, %c0_i32 : i32, i32
  }
  func.func @transform_8(%arg0: i32, %arg1: i32) -> (i32, i32) {
    %c0_i32 = arith.constant 0 : i32
    %c0_i32_0 = arith.constant 0 : i32
    return %arg0, %c0_i32 : i32, i32
  }
  func.func @transform_9(%arg0: i32, %arg1: i32) -> (i32, i32) {
    %c0_i32 = arith.constant 0 : i32
    return %arg0, %arg1 : i32, i32
  }
  func.func @transform_10(%arg0: i32, %arg1: i32) -> (i32, i32) {
    %c0_i32 = arith.constant 0 : i32
    return %arg0, %arg1 : i32, i32
  }
}

</mosaic_0001>

<llo_original>
// kernel: tpu_custom_call.1
$region0: #{tpu_custom_call.1}
  #allocation0 [shape = 'u32[]', space=smem, size = 0x4, offset = 0x4, fixed_abs, tag = 'smem constant byte address 0x4 - core index']
  #allocation1 [shape = 'u32[144,128]{1,0:T(1,128)}', space=vmem, size = 0x12000, scoped, tag = 'internal scratch']
  #allocation2 [shape = 'f32[8,128]{1,0:T(8,128)}', space=vmem, size = 0x1000, scoped, tag = 'scratch operand']
  %s0 = inlined_call_operand.hbm [shape: f32[8,1024], index: 0, kind: input, shape index: {}]
  %s1 = inlined_call_operand.hbm [shape: f32[1,1024], index: 1, kind: input, shape index: {}]
  %s2 = inlined_call_operand.hbm [shape: f32[1,1024], index: 2, kind: input, shape index: {}]
  %s3 = inlined_call_operand.vmem [shape: f32[1,1024], index: 3, kind: input, shape index: {}]
  %s4 = inlined_call_operand.hbm [shape: f32[1024,128], index: 4, kind: input, shape index: {}]
  %s5 = inlined_call_operand.vmem [shape: f32[1,128], index: 5, kind: input, shape index: {}]
  %s6 = inlined_call_operand.vmem [shape: f32[1,128], index: 6, kind: input, shape index: {}]
  %s7 = inlined_call_operand.hbm [shape: f32[8,128], index: 7, kind: output, shape index: {0}]
  %s8 = inlined_call_operand.hbm [shape: f32[8,128], index: 8, kind: output, shape index: {1}]
  %s9 = inlined_call_operand.hbm [shape: f32[8,1024], index: 9, kind: output, shape index: {2}]
  %s10 = inlined_call_operand.hbm [shape: f32[8,1024], index: 10, kind: output, shape index: {3}]
  %11 = xla_tuple %s7, %s8, %s9, %s10
  %s12 = sld [smem:[#allocation0]]
  $region86: #{tpu_custom_call.1} parent=0
    _
  %s14 = ssub.s32 1, %s12
  %s15 = scalar_select 0, %s14, %s12
  $region1: #{tpu_custom_call.1} parent=0
    #allocation3 [shape = 'u8[32768]{0}', space=vmem, size = 0x8000, scoped, tag = 'input window, operand 0, single buffered']
    #allocation4 [shape = 's32[1]{0}', space=sflag, size = 0x4, scoped, tag = 'scoped memory for tpu_custom_call.1']
    #allocation5 [shape = 's32[1]{0}', space=sflag, size = 0x4, scoped, tag = 'scoped memory for tpu_custom_call.1']
    #allocation6 [shape = 'u8[4096]{0}', space=vmem, size = 0x1000, scoped, tag = 'input window, operand 1, single buffered']
    #allocation7 [shape = 's32[1]{0}', space=sflag, size = 0x4, scoped, tag = 'scoped memory for tpu_custom_call.1']
    #allocation8 [shape = 'u8[4096]{0}', space=vmem, size = 0x1000, scoped, tag = 'input window, operand 2, single buffered']
    #allocation9 [shape = 'u8[524288]{0}', space=vmem, size = 0x80000, scoped, tag = 'input window, operand 4, single buffered']
    #allocation10 [shape = 's32[1]{0}', space=sflag, size = 0x4, scoped, tag = 'scoped memory for tpu_custom_call.1']
    #allocation11 [shape = 'u8[4096]{0}', space=vmem, size = 0x1000, scoped, tag = 'output window, operand 0, single buffered']
    #allocation12 [shape = 'u8[4096]{0}', space=vmem, size = 0x1000, scoped, tag = 'output window, operand 1, single buffered']
    #allocation13 [shape = 's32[1]{0}', space=sflag, size = 0x4, scoped, tag = 'scoped memory for tpu_custom_call.1']
    #allocation14 [shape = 'u8[32768]{0}', space=vmem, size = 0x8000, scoped, tag = 'output window, operand 2, single buffered']
    #allocation15 [shape = 'u8[32768]{0}', space=vmem, size = 0x8000, scoped, tag = 'output window, operand 3, single buffered']
    #allocation16 [shape = 's32[1]{0}', space=sflag, size = 0x4, scoped, tag = 'scoped memory for tpu_custom_call.1']
    %16 = vsyncpa [#allocation4], 0
    %17 = vsyncpa [#allocation7], 0
    %18 = vsyncpa [#allocation10], 0
    %19 = vsyncpa [#allocation5], 0
    %20 = vsyncpa [#allocation13], 0
    %21 = vsyncpa [#allocation16], 0
    // Predicated region
    $region2: #{tpu_custom_call.1} parent=1 // pred_check
      _
    $region3: #{tpu_custom_call.1} parent=1 // pred_check_branch
      %23 = sbr.rel (0) target = $region5
    $region4: #{tpu_custom_call.1} parent=1 // pred_region
      %s25 = ssub.s32 1024, 1024
      %26 = vsyncadd [#allocation4], %s25
      %s28 = sshll.u32 [#allocation3], 4
      %s29 = int_to_ptr.vmem [resolvable:$true] %s28
      %31 = dma.hbm_to_vmem [thread:$0]  %s0, 1024, %s29, [#allocation4]
    $region5: #{tpu_custom_call.1} parent=1 // pred_fallthru
      _
    // Predicated region
    $region6: #{tpu_custom_call.1} parent=1 // pred_check
      _
    $region7: #{tpu_custom_call.1} parent=1 // pred_check_branch
      %33 = sbr.rel (0) target = $region9
    $region8: #{tpu_custom_call.1} parent=1 // pred_region
      %s35 = ssub.s32 128, 128
      %36 = vsyncadd [#allocation7], %s35
      %s38 = sshll.u32 [#allocation6], 4
      %s39 = int_to_ptr.vmem [resolvable:$true] %s38
      %41 = dma.hbm_to_vmem [thread:$0]  %s1, 128, %s39, [#allocation7]
    $region9: #{tpu_custom_call.1} parent=1 // pred_fallthru
      _
    // Predicated region
    $region10: #{tpu_custom_call.1} parent=1 // pred_check
      _
    $region11: #{tpu_custom_call.1} parent=1 // pred_check_branch
      %43 = sbr.rel (0) target = $region13
    $region12: #{tpu_custom_call.1} parent=1 // pred_region
      %s45 = ssub.s32 128, 128
      %46 = vsyncadd [#allocation7], %s45
      %s48 = sshll.u32 [#allocation8], 4
      %s49 = int_to_ptr.vmem [resolvable:$true] %s48
      %51 = dma.hbm_to_vmem [thread:$0]  %s2, 128, %s49, [#allocation7]
    $region13: #{tpu_custom_call.1} parent=1 // pred_fallthru
      _
    // Predicated region
    $region14: #{tpu_custom_call.1} parent=1 // pred_check
      _
    $region15: #{tpu_custom_call.1} parent=1 // pred_check_branch
      %53 = sbr.rel (0) target = $region17
    $region16: #{tpu_custom_call.1} parent=1 // pred_region
      _
    $region17: #{tpu_custom_call.1} parent=1 // pred_fallthru
      _
    // Predicated region
    $region18: #{tpu_custom_call.1} parent=1 // pred_check
      _
    $region19: #{tpu_custom_call.1} parent=1 // pred_check_branch
      %55 = sbr.rel (0) target = $region21
    $region20: #{tpu_custom_call.1} parent=1 // pred_region
      %s57 = ssub.s32 16384, 16384
      %58 = vsyncadd [#allocation10], %s57
      %s59 = sshll.u32 [#allocation9], 4
      %s60 = int_to_ptr.vmem [resolvable:$true] %s59
      %65 = dma.hbm_to_vmem [thread:$0]  %s4, 16384, %s60, [#allocation10], 128, 128, 8
    $region21: #{tpu_custom_call.1} parent=1 // pred_fallthru
      _
    // Predicated region
    $region22: #{tpu_custom_call.1} parent=1 // pred_check
      _
    $region23: #{tpu_custom_call.1} parent=1 // pred_check_branch
      %67 = sbr.rel (0) target = $region25
    $region24: #{tpu_custom_call.1} parent=1 // pred_region
      _
    $region25: #{tpu_custom_call.1} parent=1 // pred_fallthru
      _
    // Predicated region
    $region26: #{tpu_custom_call.1} parent=1 // pred_check
      _
    $region27: #{tpu_custom_call.1} parent=1 // pred_check_branch
      %69 = sbr.rel (0) target = $region29
    $region28: #{tpu_custom_call.1} parent=1 // pred_region
      _
    $region29: #{tpu_custom_call.1} parent=1 // pred_fallthru
      _
    // Predicated region
    $region30: #{tpu_custom_call.1} parent=1 // pred_check
      _
    $region31: #{tpu_custom_call.1} parent=1 // pred_check_branch
      %71 = sbr.rel (0) target = $region33
    $region32: #{tpu_custom_call.1} parent=1 // pred_region
      %72 = dma.done [#allocation4], 1024
    $region33: #{tpu_custom_call.1} parent=1 // pred_fallthru
      _
    // Predicated region
    $region34: #{tpu_custom_call.1} parent=1 // pred_check
      _
    $region35: #{tpu_custom_call.1} parent=1 // pred_check_branch
      %74 = sbr.rel (0) target = $region37
    $region36: #{tpu_custom_call.1} parent=1 // pred_region
      %75 = dma.done [#allocation7], 128
    $region37: #{tpu_custom_call.1} parent=1 // pred_fallthru
      _
    // Predicated region
    $region38: #{tpu_custom_call.1} parent=1 // pred_check
      _
    $region39: #{tpu_custom_call.1} parent=1 // pred_check_branch
      %77 = sbr.rel (0) target = $region41
    $region40: #{tpu_custom_call.1} parent=1 // pred_region
      %78 = dma.done [#allocation7], 128
    $region41: #{tpu_custom_call.1} parent=1 // pred_fallthru
      _
    // Predicated region
    $region42: #{tpu_custom_call.1} parent=1 // pred_check
      _
    $region43: #{tpu_custom_call.1} parent=1 // pred_check_branch
      %80 = sbr.rel (0) target = $region45
    $region44: #{tpu_custom_call.1} parent=1 // pred_region
      %81 = dma.done [#allocation10], 16384
    $region45: #{tpu_custom_call.1} parent=1 // pred_fallthru
      _
    %v82 = vld [vmem:[#allocation3] sm:$0xff]
    %v83 = vld [vmem:[#allocation3 + $0x8] sm:$0xff]
    %v84 = vld [vmem:[#allocation3 + $0x10] sm:$0xff]
    %v85 = vld [vmem:[#allocation3 + $0x18] sm:$0xff]
    %v86 = vld [vmem:[#allocation3 + $0x20] sm:$0xff]
    %v87 = vld [vmem:[#allocation3 + $0x28] sm:$0xff]
    %v88 = vld [vmem:[#allocation3 + $0x30] sm:$0xff]
    %v89 = vld [vmem:[#allocation3 + $0x38] sm:$0xff]
    %v90 = vld [vmem:[#allocation6] sm:$0xff]
    %v92 = vlaneseq
    %v93 = vshrl.u32 %v92, 7
    %v94 = vsub.s32 0, %v93
    %v95 = vrot.slane %v90, %v94
    %v96 = vlaneseq
    %v97 = vshrl.u32 %v96, 7
    %v98 = vsub.s32 1, %v97
    %v99 = vrot.slane %v90, %v98
    %v100 = vlaneseq
    %v101 = vshrl.u32 %v100, 7
    %v102 = vsub.s32 2, %v101
    %v103 = vrot.slane %v90, %v102
    %v104 = vlaneseq
    %v105 = vshrl.u32 %v104, 7
    %v106 = vsub.s32 3, %v105
    %v107 = vrot.slane %v90, %v106
    %v108 = vlaneseq
    %v109 = vshrl.u32 %v108, 7
    %v110 = vsub.s32 4, %v109
    %v111 = vrot.slane %v90, %v110
    %v112 = vlaneseq
    %v113 = vshrl.u32 %v112, 7
    %v114 = vsub.s32 5, %v113
    %v115 = vrot.slane %v90, %v114
    %v116 = vlaneseq
    %v117 = vshrl.u32 %v116, 7
    %v118 = vsub.s32 6, %v117
    %v119 = vrot.slane %v90, %v118
    %v120 = vlaneseq
    %v121 = vshrl.u32 %v120, 7
    %v122 = vsub.s32 7, %v121
    %v123 = vrot.slane %v90, %v122
    %v132 = vmul.f32 %v82, %v95
    %v133 = vmul.f32 %v83, %v99
    %v134 = vmul.f32 %v84, %v103
    %v135 = vmul.f32 %v85, %v107
    %v136 = vmul.f32 %v86, %v111
    %v137 = vmul.f32 %v87, %v115
    %v138 = vmul.f32 %v88, %v119
    %v139 = vmul.f32 %v89, %v123
    %v140 = vld [vmem:[#allocation8] sm:$0xff]
    %v142 = vlaneseq
    %v143 = vshrl.u32 %v142, 7
    %v144 = vsub.s32 0, %v143
    %v145 = vrot.slane %v140, %v144
    %v146 = vlaneseq
    %v147 = vshrl.u32 %v146, 7
    %v148 = vsub.s32 1, %v147
    %v149 = vrot.slane %v140, %v148
    %v150 = vlaneseq
    %v151 = vshrl.u32 %v150, 7
    %v152 = vsub.s32 2, %v151
    %v153 = vrot.slane %v140, %v152
    %v154 = vlaneseq
    %v155 = vshrl.u32 %v154, 7
    %v156 = vsub.s32 3, %v155
    %v157 = vrot.slane %v140, %v156
    %v158 = vlaneseq
    %v159 = vshrl.u32 %v158, 7
    %v160 = vsub.s32 4, %v159
    %v161 = vrot.slane %v140, %v160
    %v162 = vlaneseq
    %v163 = vshrl.u32 %v162, 7
    %v164 = vsub.s32 5, %v163
    %v165 = vrot.slane %v140, %v164
    %v166 = vlaneseq
    %v167 = vshrl.u32 %v166, 7
    %v168 = vsub.s32 6, %v167
    %v169 = vrot.slane %v140, %v168
    %v170 = vlaneseq
    %v171 = vshrl.u32 %v170, 7
    %v172 = vsub.s32 7, %v171
    %v173 = vrot.slane %v140, %v172
    %v182 = vadd.f32 %v132, %v145
    %v183 = vadd.f32 %v133, %v149
    %v184 = vadd.f32 %v134, %v153
    %v185 = vadd.f32 %v135, %v157
    %v186 = vadd.f32 %v136, %v161
    %v187 = vadd.f32 %v137, %v165
    %v188 = vadd.f32 %v138, %v169
    %v189 = vadd.f32 %v139, %v173
    %190 = vst [vmem:[#allocation15] sm:$0xff] %v182
    %191 = vst [vmem:[#allocation15 + $0x8] sm:$0xff] %v183
    %192 = vst [vmem:[#allocation15 + $0x10] sm:$0xff] %v184
    %193 = vst [vmem:[#allocation15 + $0x18] sm:$0xff] %v185
    %194 = vst [vmem:[#allocation15 + $0x20] sm:$0xff] %v186
    %195 = vst [vmem:[#allocation15 + $0x28] sm:$0xff] %v187
    %196 = vst [vmem:[#allocation15 + $0x30] sm:$0xff] %v188
    %197 = vst [vmem:[#allocation15 + $0x38] sm:$0xff] %v189
    %v198 = vld [vmem:[%s3] sm:$0xff]
    %v200 = vlaneseq
    %v201 = vshrl.u32 %v200, 7
    %v202 = vsub.s32 0, %v201
    %v203 = vrot.slane %v198, %v202
    %v204 = vlaneseq
    %v205 = vshrl.u32 %v204, 7
    %v206 = vsub.s32 1, %v205
    %v207 = vrot.slane %v198, %v206
    %v208 = vlaneseq
    %v209 = vshrl.u32 %v208, 7
    %v210 = vsub.s32 2, %v209
    %v211 = vrot.slane %v198, %v210
    %v212 = vlaneseq
    %v213 = vshrl.u32 %v212, 7
    %v214 = vsub.s32 3, %v213
    %v215 = vrot.slane %v198, %v214
    %v216 = vlaneseq
    %v217 = vshrl.u32 %v216, 7
    %v218 = vsub.s32 4, %v217
    %v219 = vrot.slane %v198, %v218
    %v220 = vlaneseq
    %v221 = vshrl.u32 %v220, 7
    %v222 = vsub.s32 5, %v221
    %v223 = vrot.slane %v198, %v222
    %v224 = vlaneseq
    %v225 = vshrl.u32 %v224, 7
    %v226 = vsub.s32 6, %v225
    %v227 = vrot.slane %v198, %v226
    %v228 = vlaneseq
    %v229 = vshrl.u32 %v228, 7
    %v230 = vsub.s32 7, %v229
    %v231 = vrot.slane %v198, %v230
    %v240 = vadd.f32 %v182, %v203
    %v241 = vadd.f32 %v183, %v207
    %v242 = vadd.f32 %v184, %v211
    %v243 = vadd.f32 %v185, %v215
    %v244 = vadd.f32 %v186, %v219
    %v245 = vadd.f32 %v187, %v223
    %v246 = vadd.f32 %v188, %v227
    %v247 = vadd.f32 %v189, %v231
    %248 = vst [vmem:[#allocation14] sm:$0xff] %v240
    %249 = vst [vmem:[#allocation14 + $0x8] sm:$0xff] %v241
    %250 = vst [vmem:[#allocation14 + $0x10] sm:$0xff] %v242
    %251 = vst [vmem:[#allocation14 + $0x18] sm:$0xff] %v243
    %252 = vst [vmem:[#allocation14 + $0x20] sm:$0xff] %v244
    %253 = vst [vmem:[#allocation14 + $0x28] sm:$0xff] %v245
    %254 = vst [vmem:[#allocation14 + $0x30] sm:$0xff] %v246
    %255 = vst [vmem:[#allocation14 + $0x38] sm:$0xff] %v247
    %p256 = scmp.eq.s32.totalorder 0, 0
    // Predicated region
    $region46: #{tpu_custom_call.1} parent=1 // pred_check
      %p257 = pneg %p256
    $region47: #{tpu_custom_call.1} parent=1 // pred_check_branch
      %259 = sbr.rel (%p257) target = $region49
    $region48: #{tpu_custom_call.1} parent=1 // pred_region
      %260 = vst [vmem:[#allocation2] sm:$0xff] 0.0
    $region49: #{tpu_custom_call.1} parent=1 // pred_fallthru
      _
    %v261 = vld [vmem:[#allocation2] sm:$0xff]
    %v262 = vld [vmem:[#allocation9] sm:$0xff]
    %v263 = vld [vmem:[#allocation9 + $0x8] sm:$0xff]
    %v264 = vld [vmem:[#allocation9 + $0x10] sm:$0xff]
    %v265 = vld [vmem:[#allocation9 + $0x18] sm:$0xff]
    %v266 = vld [vmem:[#allocation9 + $0x20] sm:$0xff]
    %v267 = vld [vmem:[#allocation9 + $0x28] sm:$0xff]
    %v268 = vld [vmem:[#allocation9 + $0x30] sm:$0xff]
    %v269 = vld [vmem:[#allocation9 + $0x38] sm:$0xff]
    %v270 = vld [vmem:[#allocation9 + $0x40] sm:$0xff]
    %v271 = vld [vmem:[#allocation9 + $0x48] sm:$0xff]
    %v272 = vld [vmem:[#allocation9 + $0x50] sm:$0xff]
    %v273 = vld [vmem:[#allocation9 + $0x58] sm:$0xff]
    %v274 = vld [vmem:[#allocation9 + $0x60] sm:$0xff]
    %v275 = vld [vmem:[#allocation9 + $0x68] sm:$0xff]
    %v276 = vld [vmem:[#allocation9 + $0x70] sm:$0xff]
    %v277 = vld [vmem:[#allocation9 + $0x78] sm:$0xff]
    %v278 = vld [vmem:[#allocation9 + $0x80] sm:$0xff]
    %v279 = vld [vmem:[#allocation9 + $0x88] sm:$0xff]
    %v280 = vld [vmem:[#allocation9 + $0x90] sm:$0xff]
    %v281 = vld [vmem:[#allocation9 + $0x98] sm:$0xff]
    %v282 = vld [vmem:[#allocation9 + $0xa0] sm:$0xff]
    %v283 = vld [vmem:[#allocation9 + $0xa8] sm:$0xff]
    %v284 = vld [vmem:[#allocation9 + $0xb0] sm:$0xff]
    %v285 = vld [vmem:[#allocation9 + $0xb8] sm:$0xff]
    %v286 = vld [vmem:[#allocation9 + $0xc0] sm:$0xff]
    %v287 = vld [vmem:[#allocation9 + $0xc8] sm:$0xff]
    %v288 = vld [vmem:[#allocation9 + $0xd0] sm:$0xff]
    %v289 = vld [vmem:[#allocation9 + $0xd8] sm:$0xff]
    %v290 = vld [vmem:[#allocation9 + $0xe0] sm:$0xff]
    %v291 = vld [vmem:[#allocation9 + $0xe8] sm:$0xff]
    %v292 = vld [vmem:[#allocation9 + $0xf0] sm:$0xff]
    %v293 = vld [vmem:[#allocation9 + $0xf8] sm:$0xff]
    %v294 = vld [vmem:[#allocation9 + $0x100] sm:$0xff]
    %v295 = vld [vmem:[#allocation9 + $0x108] sm:$0xff]
    %v296 = vld [vmem:[#allocation9 + $0x110] sm:$0xff]
    %v297 = vld [vmem:[#allocation9 + $0x118] sm:$0xff]
    %v298 = vld [vmem:[#allocation9 + $0x120] sm:$0xff]
    %v299 = vld [vmem:[#allocation9 + $0x128] sm:$0xff]
    %v300 = vld [vmem:[#allocation9 + $0x130] sm:$0xff]
    %v301 = vld [vmem:[#allocation9 + $0x138] sm:$0xff]
    %v302 = vld [vmem:[#allocation9 + $0x140] sm:$0xff]
    %v303 = vld [vmem:[#allocation9 + $0x148] sm:$0xff]
    %v304 = vld [vmem:[#allocation9 + $0x150] sm:$0xff]
    %v305 = vld [vmem:[#allocation9 + $0x158] sm:$0xff]
    %v306 = vld [vmem:[#allocation9 + $0x160] sm:$0xff]
    %v307 = vld [vmem:[#allocation9 + $0x168] sm:$0xff]
    %v308 = vld [vmem:[#allocation9 + $0x170] sm:$0xff]
    %v309 = vld [vmem:[#allocation9 + $0x178] sm:$0xff]
    %v310 = vld [vmem:[#allocation9 + $0x180] sm:$0xff]
    %v311 = vld [vmem:[#allocation9 + $0x188] sm:$0xff]
    %v312 = vld [vmem:[#allocation9 + $0x190] sm:$0xff]
    %v313 = vld [vmem:[#allocation9 + $0x198] sm:$0xff]
    %v314 = vld [vmem:[#allocation9 + $0x1a0] sm:$0xff]
    %v315 = vld [vmem:[#allocation9 + $0x1a8] sm:$0xff]
    %v316 = vld [vmem:[#allocation9 + $0x1b0] sm:$0xff]
    %v317 = vld [vmem:[#allocation9 + $0x1b8] sm:$0xff]
    %v318 = vld [vmem:[#allocation9 + $0x1c0] sm:$0xff]
    %v319 = vld [vmem:[#allocation9 + $0x1c8] sm:$0xff]
    %v320 = vld [vmem:[#allocation9 + $0x1d0] sm:$0xff]
    %v321 = vld [vmem:[#allocation9 + $0x1d8] sm:$0xff]
    %v322 = vld [vmem:[#allocation9 + $0x1e0] sm:$0xff]
    %v323 = vld [vmem:[#allocation9 + $0x1e8] sm:$0xff]
    %v324 = vld [vmem:[#allocation9 + $0x1f0] sm:$0xff]
    %v325 = vld [vmem:[#allocation9 + $0x1f8] sm:$0xff]
    %v326 = vld [vmem:[#allocation9 + $0x200] sm:$0xff]
    %v327 = vld [vmem:[#allocation9 + $0x208] sm:$0xff]
    %v328 = vld [vmem:[#allocation9 + $0x210] sm:$0xff]
    %v329 = vld [vmem:[#allocation9 + $0x218] sm:$0xff]
    %v330 = vld [vmem:[#allocation9 + $0x220] sm:$0xff]
    %v331 = vld [vmem:[#allocation9 + $0x228] sm:$0xff]
    %v332 = vld [vmem:[#allocation9 + $0x230] sm:$0xff]
    %v333 = vld [vmem:[#allocation9 + $0x238] sm:$0xff]
    %v334 = vld [vmem:[#allocation9 + $0x240] sm:$0xff]
    %v335 = vld [vmem:[#allocation9 + $0x248] sm:$0xff]
    %v336 = vld [vmem:[#allocation9 + $0x250] sm:$0xff]
    %v337 = vld [vmem:[#allocation9 + $0x258] sm:$0xff]
    %v338 = vld [vmem:[#allocation9 + $0x260] sm:$0xff]
    %v339 = vld [vmem:[#allocation9 + $0x268] sm:$0xff]
    %v340 = vld [vmem:[#allocation9 + $0x270] sm:$0xff]
    %v341 = vld [vmem:[#allocation9 + $0x278] sm:$0xff]
    %v342 = vld [vmem:[#allocation9 + $0x280] sm:$0xff]
    %v343 = vld [vmem:[#allocation9 + $0x288] sm:$0xff]
    %v344 = vld [vmem:[#allocation9 + $0x290] sm:$0xff]
    %v345 = vld [vmem:[#allocation9 + $0x298] sm:$0xff]
    %v346 = vld [vmem:[#allocation9 + $0x2a0] sm:$0xff]
    %v347 = vld [vmem:[#allocation9 + $0x2a8] sm:$0xff]
    %v348 = vld [vmem:[#allocation9 + $0x2b0] sm:$0xff]
    %v349 = vld [vmem:[#allocation9 + $0x2b8] sm:$0xff]
    %v350 = vld [vmem:[#allocation9 + $0x2c0] sm:$0xff]
    %v351 = vld [vmem:[#allocation9 + $0x2c8] sm:$0xff]
    %v352 = vld [vmem:[#allocation9 + $0x2d0] sm:$0xff]
    %v353 = vld [vmem:[#allocation9 + $0x2d8] sm:$0xff]
    %v354 = vld [vmem:[#allocation9 + $0x2e0] sm:$0xff]
    %v355 = vld [vmem:[#allocation9 + $0x2e8] sm:$0xff]
    %v356 = vld [vmem:[#allocation9 + $0x2f0] sm:$0xff]
    %v357 = vld [vmem:[#allocation9 + $0x2f8] sm:$0xff]
    %v358 = vld [vmem:[#allocation9 + $0x300] sm:$0xff]
    %v359 = vld [vmem:[#allocation9 + $0x308] sm:$0xff]
    %v360 = vld [vmem:[#allocation9 + $0x310] sm:$0xff]
    %v361 = vld [vmem:[#allocation9 + $0x318] sm:$0xff]
    %v362 = vld [vmem:[#allocation9 + $0x320] sm:$0xff]
    %v363 = vld [vmem:[#allocation9 + $0x328] sm:$0xff]
    %v364 = vld [vmem:[#allocation9 + $0x330] sm:$0xff]
    %v365 = vld [vmem:[#allocation9 + $0x338] sm:$0xff]
    %v366 = vld [vmem:[#allocation9 + $0x340] sm:$0xff]
    %v367 = vld [vmem:[#allocation9 + $0x348] sm:$0xff]
    %v368 = vld [vmem:[#allocation9 + $0x350] sm:$0xff]
    %v369 = vld [vmem:[#allocation9 + $0x358] sm:$0xff]
    %v370 = vld [vmem:[#allocation9 + $0x360] sm:$0xff]
    %v371 = vld [vmem:[#allocation9 + $0x368] sm:$0xff]
    %v372 = vld [vmem:[#allocation9 + $0x370] sm:$0xff]
    %v373 = vld [vmem:[#allocation9 + $0x378] sm:$0xff]
    %v374 = vld [vmem:[#allocation9 + $0x380] sm:$0xff]
    %v375 = vld [vmem:[#allocation9 + $0x388] sm:$0xff]
    %v376 = vld [vmem:[#allocation9 + $0x390] sm:$0xff]
    %v377 = vld [vmem:[#allocation9 + $0x398] sm:$0xff]
    %v378 = vld [vmem:[#allocation9 + $0x3a0] sm:$0xff]
    %v379 = vld [vmem:[#allocation9 + $0x3a8] sm:$0xff]
    %v380 = vld [vmem:[#allocation9 + $0x3b0] sm:$0xff]
    %v381 = vld [vmem:[#allocation9 + $0x3b8] sm:$0xff]
    %v382 = vld [vmem:[#allocation9 + $0x3c0] sm:$0xff]
    %v383 = vld [vmem:[#allocation9 + $0x3c8] sm:$0xff]
    %v384 = vld [vmem:[#allocation9 + $0x3d0] sm:$0xff]
    %v385 = vld [vmem:[#allocation9 + $0x3d8] sm:$0xff]
    %v386 = vld [vmem:[#allocation9 + $0x3e0] sm:$0xff]
    %v387 = vld [vmem:[#allocation9 + $0x3e8] sm:$0xff]
    %v388 = vld [vmem:[#allocation9 + $0x3f0] sm:$0xff]
    %v389 = vld [vmem:[#allocation9 + $0x3f8] sm:$0xff]
    %390 = vmatprep.subr.mxu0 0.0
    %391 = vmatpush1.msra.mxu0 %v262
    %392 = vmatprep.subr.mxu0 0.0
    %393 = vmatpush1.msra.mxu0 %v263
    %394 = vmatprep.subr.mxu0 0.0
    %395 = vmatpush1.msra.mxu0 %v264
    %396 = vmatprep.subr.mxu0 0.0
    %397 = vmatpush1.msra.mxu0 %v265
    %398 = vmatprep.subr.mxu0 0.0
    %399 = vmatpush1.msra.mxu0 %v266
    %400 = vmatprep.subr.mxu0 0.0
    %401 = vmatpush1.msra.mxu0 %v267
    %402 = vmatprep.subr.mxu0 0.0
    %403 = vmatpush1.msra.mxu0 %v268
    %404 = vmatprep.subr.mxu0 0.0
    %405 = vmatpush1.msra.mxu0 %v269
    %406 = vmatprep.subr.mxu0 0.0
    %407 = vmatpush1.msra.mxu0 %v270
    %408 = vmatprep.subr.mxu0 0.0
    %409 = vmatpush1.msra.mxu0 %v271
    %410 = vmatprep.subr.mxu0 0.0
    %411 = vmatpush1.msra.mxu0 %v272
    %412 = vmatprep.subr.mxu0 0.0
    %413 = vmatpush1.msra.mxu0 %v273
    %414 = vmatprep.subr.mxu0 0.0
    %415 = vmatpush1.msra.mxu0 %v274
    %416 = vmatprep.subr.mxu0 0.0
    %417 = vmatpush1.msra.mxu0 %v275
    %418 = vmatprep.subr.mxu0 0.0
    %419 = vmatpush1.msra.mxu0 %v276
    %420 = vmatprep.subr.mxu0 0.0
    %421 = vmatpush1.msra.mxu0 %v277
    %422 = vmatprep.subr.mxu0 0.0
    %423 = vmatpush1.msra.mxu0 %v278
    %424 = vmatprep.subr.mxu0 0.0
    %425 = vmatpush1.msra.mxu0 %v279
    %426 = vmatprep.subr.mxu0 0.0
    %427 = vmatpush1.msra.mxu0 %v280
    %428 = vmatprep.subr.mxu0 0.0
    %429 = vmatpush1.msra.mxu0 %v281
    %430 = vmatprep.subr.mxu0 0.0
    %431 = vmatpush1.msra.mxu0 %v282
    %432 = vmatprep.subr.mxu0 0.0
    %433 = vmatpush1.msra.mxu0 %v283
    %434 = vmatprep.subr.mxu0 0.0
    %435 = vmatpush1.msra.mxu0 %v284
    %436 = vmatprep.subr.mxu0 0.0
    %437 = vmatpush1.msra.mxu0 %v285
    %438 = vmatprep.subr.mxu0 0.0
    %439 = vmatpush1.msra.mxu0 %v286
    %440 = vmatprep.subr.mxu0 0.0
    %441 = vmatpush1.msra.mxu0 %v287
    %442 = vmatprep.subr.mxu0 0.0
    %443 = vmatpush1.msra.mxu0 %v288
    %444 = vmatprep.subr.mxu0 0.0
    %445 = vmatpush1.msra.mxu0 %v289
    %446 = vmatprep.subr.mxu0 0.0
    %447 = vmatpush1.msra.mxu0 %v290
    %448 = vmatprep.subr.mxu0 0.0
    %449 = vmatpush1.msra.mxu0 %v291
    %450 = vmatprep.subr.mxu0 0.0
    %451 = vmatpush1.msra.mxu0 %v292
    %452 = vmatprep.subr.mxu0 0.0
    %453 = vmatpush1.msra.mxu0 %v293
    %454 = vmatprep.mubr.f32.mxu0 %v183
    %455 = vmatmul.mubr.f32.gmra.mrb[0].mxu0 %v182
    %v456 = vpop.f32.mrb[0].mxu0
    %v457 = vadd.f32 0.0, %v456
    %v458 = vpop.f32.mrb[0].mxu0
    %459 = vdwg.mxu0
    %460 = vmatprep.subr.mxu0 0.0
    %461 = vmatpush1.msra.mxu0 %v294
    %462 = vmatprep.subr.mxu0 0.0
    %463 = vmatpush1.msra.mxu0 %v295
    %464 = vmatprep.subr.mxu0 0.0
    %465 = vmatpush1.msra.mxu0 %v296
    %466 = vmatprep.subr.mxu0 0.0
    %467 = vmatpush1.msra.mxu0 %v297
    %468 = vmatprep.subr.mxu0 0.0
    %469 = vmatpush1.msra.mxu0 %v298
    %470 = vmatprep.subr.mxu0 0.0
    %471 = vmatpush1.msra.mxu0 %v299
    %472 = vmatprep.subr.mxu0 0.0
    %473 = vmatpush1.msra.mxu0 %v300
    %474 = vmatprep.subr.mxu0 0.0
    %475 = vmatpush1.msra.mxu0 %v301
    %476 = vmatprep.subr.mxu0 0.0
    %477 = vmatpush1.msra.mxu0 %v302
    %478 = vmatprep.subr.mxu0 0.0
    %479 = vmatpush1.msra.mxu0 %v303
    %480 = vmatprep.subr.mxu0 0.0
    %481 = vmatpush1.msra.mxu0 %v304
    %482 = vmatprep.subr.mxu0 0.0
    %483 = vmatpush1.msra.mxu0 %v305
    %484 = vmatprep.subr.mxu0 0.0
    %485 = vmatpush1.msra.mxu0 %v306
    %486 = vmatprep.subr.mxu0 0.0
    %487 = vmatpush1.msra.mxu0 %v307
    %488 = vmatprep.subr.mxu0 0.0
    %489 = vmatpush1.msra.mxu0 %v308
    %490 = vmatprep.subr.mxu0 0.0
    %491 = vmatpush1.msra.mxu0 %v309
    %492 = vmatprep.subr.mxu0 0.0
    %493 = vmatpush1.msra.mxu0 %v310
    %494 = vmatprep.subr.mxu0 0.0
    %495 = vmatpush1.msra.mxu0 %v311
    %496 = vmatprep.subr.mxu0 0.0
    %497 = vmatpush1.msra.mxu0 %v312
    %498 = vmatprep.subr.mxu0 0.0
    %499 = vmatpush1.msra.mxu0 %v313
    %500 = vmatprep.subr.mxu0 0.0
    %501 = vmatpush1.msra.mxu0 %v314
    %502 = vmatprep.subr.mxu0 0.0
    %503 = vmatpush1.msra.mxu0 %v315
    %504 = vmatprep.subr.mxu0 0.0
    %505 = vmatpush1.msra.mxu0 %v316
    %506 = vmatprep.subr.mxu0 0.0
    %507 = vmatpush1.msra.mxu0 %v317
    %508 = vmatprep.subr.mxu0 0.0
    %509 = vmatpush1.msra.mxu0 %v318
    %510 = vmatprep.subr.mxu0 0.0
    %511 = vmatpush1.msra.mxu0 %v319
    %512 = vmatprep.subr.mxu0 0.0
    %513 = vmatpush1.msra.mxu0 %v320
    %514 = vmatprep.subr.mxu0 0.0
    %515 = vmatpush1.msra.mxu0 %v321
    %516 = vmatprep.subr.mxu0 0.0
    %517 = vmatpush1.msra.mxu0 %v322
    %518 = vmatprep.subr.mxu0 0.0
    %519 = vmatpush1.msra.mxu0 %v323
    %520 = vmatprep.subr.mxu0 0.0
    %521 = vmatpush1.msra.mxu0 %v324
    %522 = vmatprep.subr.mxu0 0.0
    %523 = vmatpush1.msra.mxu0 %v325
    %524 = vmatprep.mubr.f32.mxu0 %v185
    %525 = vmatmul.mubr.f32.gmra.mrb[0].mxu0 %v184
    %v526 = vpop.f32.mrb[0].mxu0
    %v527 = vadd.f32 %v457, %v526
    %v528 = vpop.f32.mrb[0].mxu0
    %529 = vdwg.mxu0
    %530 = vmatprep.subr.mxu0 0.0
    %531 = vmatpush1.msra.mxu0 %v326
    %532 = vmatprep.subr.mxu0 0.0
    %533 = vmatpush1.msra.mxu0 %v327
    %534 = vmatprep.subr.mxu0 0.0
    %535 = vmatpush1.msra.mxu0 %v328
    %536 = vmatprep.subr.mxu0 0.0
    %537 = vmatpush1.msra.mxu0 %v329
    %538 = vmatprep.subr.mxu0 0.0
    %539 = vmatpush1.msra.mxu0 %v330
    %540 = vmatprep.subr.mxu0 0.0
    %541 = vmatpush1.msra.mxu0 %v331
    %542 = vmatprep.subr.mxu0 0.0
    %543 = vmatpush1.msra.mxu0 %v332
    %544 = vmatprep.subr.mxu0 0.0
    %545 = vmatpush1.msra.mxu0 %v333
    %546 = vmatprep.subr.mxu0 0.0
    %547 = vmatpush1.msra.mxu0 %v334
    %548 = vmatprep.subr.mxu0 0.0
    %549 = vmatpush1.msra.mxu0 %v335
    %550 = vmatprep.subr.mxu0 0.0
    %551 = vmatpush1.msra.mxu0 %v336
    %552 = vmatprep.subr.mxu0 0.0
    %553 = vmatpush1.msra.mxu0 %v337
    %554 = vmatprep.subr.mxu0 0.0
    %555 = vmatpush1.msra.mxu0 %v338
    %556 = vmatprep.subr.mxu0 0.0
    %557 = vmatpush1.msra.mxu0 %v339
    %558 = vmatprep.subr.mxu0 0.0
    %559 = vmatpush1.msra.mxu0 %v340
    %560 = vmatprep.subr.mxu0 0.0
    %561 = vmatpush1.msra.mxu0 %v341
    %562 = vmatprep.subr.mxu0 0.0
    %563 = vmatpush1.msra.mxu0 %v342
    %564 = vmatprep.subr.mxu0 0.0
    %565 = vmatpush1.msra.mxu0 %v343
    %566 = vmatprep.subr.mxu0 0.0
    %567 = vmatpush1.msra.mxu0 %v344
    %568 = vmatprep.subr.mxu0 0.0
    %569 = vmatpush1.msra.mxu0 %v345
    %570 = vmatprep.subr.mxu0 0.0
    %571 = vmatpush1.msra.mxu0 %v346
    %572 = vmatprep.subr.mxu0 0.0
    %573 = vmatpush1.msra.mxu0 %v347
    %574 = vmatprep.subr.mxu0 0.0
    %575 = vmatpush1.msra.mxu0 %v348
    %576 = vmatprep.subr.mxu0 0.0
    %577 = vmatpush1.msra.mxu0 %v349
    %578 = vmatprep.subr.mxu0 0.0
    %579 = vmatpush1.msra.mxu0 %v350
    %580 = vmatprep.subr.mxu0 0.0
    %581 = vmatpush1.msra.mxu0 %v351
    %582 = vmatprep.subr.mxu0 0.0
    %583 = vmatpush1.msra.mxu0 %v352
    %584 = vmatprep.subr.mxu0 0.0
    %585 = vmatpush1.msra.mxu0 %v353
    %586 = vmatprep.subr.mxu0 0.0
    %587 = vmatpush1.msra.mxu0 %v354
    %588 = vmatprep.subr.mxu0 0.0
    %589 = vmatpush1.msra.mxu0 %v355
    %590 = vmatprep.subr.mxu0 0.0
    %591 = vmatpush1.msra.mxu0 %v356
    %592 = vmatprep.subr.mxu0 0.0
    %593 = vmatpush1.msra.mxu0 %v357
    %594 = vmatprep.mubr.f32.mxu0 %v187
    %595 = vmatmul.mubr.f32.gmra.mrb[0].mxu0 %v186
    %v596 = vpop.f32.mrb[0].mxu0
    %v597 = vadd.f32 %v527, %v596
    %v598 = vpop.f32.mrb[0].mxu0
    %599 = vdwg.mxu0
    %600 = vmatprep.subr.mxu0 0.0
    %601 = vmatpush1.msra.mxu0 %v358
    %602 = vmatprep.subr.mxu0 0.0
    %603 = vmatpush1.msra.mxu0 %v359
    %604 = vmatprep.subr.mxu0 0.0
    %605 = vmatpush1.msra.mxu0 %v360
    %606 = vmatprep.subr.mxu0 0.0
    %607 = vmatpush1.msra.mxu0 %v361
    %608 = vmatprep.subr.mxu0 0.0
    %609 = vmatpush1.msra.mxu0 %v362
    %610 = vmatprep.subr.mxu0 0.0
    %611 = vmatpush1.msra.mxu0 %v363
    %612 = vmatprep.subr.mxu0 0.0
    %613 = vmatpush1.msra.mxu0 %v364
    %614 = vmatprep.subr.mxu0 0.0
    %615 = vmatpush1.msra.mxu0 %v365
    %616 = vmatprep.subr.mxu0 0.0
    %617 = vmatpush1.msra.mxu0 %v366
    %618 = vmatprep.subr.mxu0 0.0
    %619 = vmatpush1.msra.mxu0 %v367
    %620 = vmatprep.subr.mxu0 0.0
    %621 = vmatpush1.msra.mxu0 %v368
    %622 = vmatprep.subr.mxu0 0.0
    %623 = vmatpush1.msra.mxu0 %v369
    %624 = vmatprep.subr.mxu0 0.0
    %625 = vmatpush1.msra.mxu0 %v370
    %626 = vmatprep.subr.mxu0 0.0
    %627 = vmatpush1.msra.mxu0 %v371
    %628 = vmatprep.subr.mxu0 0.0
    %629 = vmatpush1.msra.mxu0 %v372
    %630 = vmatprep.subr.mxu0 0.0
    %631 = vmatpush1.msra.mxu0 %v373
    %632 = vmatprep.subr.mxu0 0.0
    %633 = vmatpush1.msra.mxu0 %v374
    %634 = vmatprep.subr.mxu0 0.0
    %635 = vmatpush1.msra.mxu0 %v375
    %636 = vmatprep.subr.mxu0 0.0
    %637 = vmatpush1.msra.mxu0 %v376
    %638 = vmatprep.subr.mxu0 0.0
    %639 = vmatpush1.msra.mxu0 %v377
    %640 = vmatprep.subr.mxu0 0.0
    %641 = vmatpush1.msra.mxu0 %v378
    %642 = vmatprep.subr.mxu0 0.0
    %643 = vmatpush1.msra.mxu0 %v379
    %644 = vmatprep.subr.mxu0 0.0
    %645 = vmatpush1.msra.mxu0 %v380
    %646 = vmatprep.subr.mxu0 0.0
    %647 = vmatpush1.msra.mxu0 %v381
    %648 = vmatprep.subr.mxu0 0.0
    %649 = vmatpush1.msra.mxu0 %v382
    %650 = vmatprep.subr.mxu0 0.0
    %651 = vmatpush1.msra.mxu0 %v383
    %652 = vmatprep.subr.mxu0 0.0
    %653 = vmatpush1.msra.mxu0 %v384
    %654 = vmatprep.subr.mxu0 0.0
    %655 = vmatpush1.msra.mxu0 %v385
    %656 = vmatprep.subr.mxu0 0.0
    %657 = vmatpush1.msra.mxu0 %v386
    %658 = vmatprep.subr.mxu0 0.0
    %659 = vmatpush1.msra.mxu0 %v387
    %660 = vmatprep.subr.mxu0 0.0
    %661 = vmatpush1.msra.mxu0 %v388
    %662 = vmatprep.subr.mxu0 0.0
    %663 = vmatpush1.msra.mxu0 %v389
    %664 = vmatprep.mubr.f32.mxu0 %v189
    %665 = vmatmul.mubr.f32.gmra.mrb[0].mxu0 %v188
    %v666 = vpop.f32.mrb[0].mxu0
    %v667 = vadd.f32 %v597, %v666
    %v668 = vpop.f32.mrb[0].mxu0
    %669 = vdwg.mxu0
    %v670 = vadd.f32 %v261, %v667
    %671 = vst [vmem:[#allocation2] sm:$0xff] %v670
    // Predicated region
    $region50: #{tpu_custom_call.1} parent=1 // pred_check
      %p672 = pneg %p256
    $region51: #{tpu_custom_call.1} parent=1 // pred_check_branch
      %674 = sbr.rel (%p672) target = $region53
    $region52: #{tpu_custom_call.1} parent=1 // pred_region
      %v675 = vld [vmem:[#allocation2] sm:$0xff]
      %v676 = vld [vmem:[%s5] sm:$0x1]
      %v678 = vlaneseq
      %v679 = vshrl.u32 %v678, 7
      %v680 = vsub.s32 0, %v679
      %v681 = vrot.slane %v676, %v680
      %v683 = vadd.f32 %v675, %v681
      %684 = vst [vmem:[#allocation12] sm:$0xff] %v683
      %v685 = vld [vmem:[%s6] sm:$0x1]
      %v687 = vlaneseq
      %v688 = vshrl.u32 %v687, 7
      %v689 = vsub.s32 0, %v688
      %v690 = vrot.slane %v685, %v689
      %v692 = vadd.f32 %v683, %v690
      %693 = vst [vmem:[#allocation11] sm:$0xff] %v692
    $region53: #{tpu_custom_call.1} parent=1 // pred_fallthru
      _
    // Predicated region
    $region54: #{tpu_custom_call.1} parent=1 // pred_check
      _
    $region55: #{tpu_custom_call.1} parent=1 // pred_check_branch
      %695 = sbr.rel (0) target = $region57
    $region56: #{tpu_custom_call.1} parent=1 // pred_region
      %s697 = ssub.s32 128, 128
      %698 = vsyncadd [#allocation5], %s697
      %s700 = sshll.u32 [#allocation11], 4
      %s701 = int_to_ptr.vmem [resolvable:$true] %s700
      %703 = dma.vmem_to_hbm [thread:$0]  %s701, 128, %s7, [#allocation5]
    $region57: #{tpu_custom_call.1} parent=1 // pred_fallthru
      _
    // Predicated region
    $region58: #{tpu_custom_call.1} parent=1 // pred_check
      _
    $region59: #{tpu_custom_call.1} parent=1 // pred_check_branch
      %705 = sbr.rel (0) target = $region61
    $region60: #{tpu_custom_call.1} parent=1 // pred_region
      %s707 = ssub.s32 128, 128
      %708 = vsyncadd [#allocation13], %s707
      %s710 = sshll.u32 [#allocation12], 4
      %s711 = int_to_ptr.vmem [resolvable:$true] %s710
      %713 = dma.vmem_to_hbm [thread:$0]  %s711, 128, %s8, [#allocation13]
    $region61: #{tpu_custom_call.1} parent=1 // pred_fallthru
      _
    // Predicated region
    $region62: #{tpu_custom_call.1} parent=1 // pred_check
      _
    $region63: #{tpu_custom_call.1} parent=1 // pred_check_branch
      %715 = sbr.rel (0) target = $region65
    $region64: #{tpu_custom_call.1} parent=1 // pred_region
      %s717 = ssub.s32 1024, 1024
      %718 = vsyncadd [#allocation13], %s717
      %s720 = sshll.u32 [#allocation14], 4
      %s721 = int_to_ptr.vmem [resolvable:$true] %s720
      %723 = dma.vmem_to_hbm [thread:$0]  %s721, 1024, %s9, [#allocation13]
    $region65: #{tpu_custom_call.1} parent=1 // pred_fallthru
      _
    // Predicated region
    $region66: #{tpu_custom_call.1} parent=1 // pred_check
      _
    $region67: #{tpu_custom_call.1} parent=1 // pred_check_branch
      %725 = sbr.rel (0) target = $region69
    $region68: #{tpu_custom_call.1} parent=1 // pred_region
      %s727 = ssub.s32 1024, 1024
      %728 = vsyncadd [#allocation16], %s727
      %s730 = sshll.u32 [#allocation15], 4
      %s731 = int_to_ptr.vmem [resolvable:$true] %s730
      %733 = dma.vmem_to_hbm [thread:$0]  %s731, 1024, %s10, [#allocation16]
    $region69: #{tpu_custom_call.1} parent=1 // pred_fallthru
      _
    // Predicated region
    $region70: #{tpu_custom_call.1} parent=1 // pred_check
      _
    $region71: #{tpu_custom_call.1} parent=1 // pred_check_branch
      %735 = sbr.rel (0) target = $region73
    $region72: #{tpu_custom_call.1} parent=1 // pred_region
      %736 = dma.done [#allocation5], 128
    $region73: #{tpu_custom_call.1} parent=1 // pred_fallthru
      _
    // Predicated region
    $region74: #{tpu_custom_call.1} parent=1 // pred_check
      _
    $region75: #{tpu_custom_call.1} parent=1 // pred_check_branch
      %738 = sbr.rel (0) target = $region77
    $region76: #{tpu_custom_call.1} parent=1 // pred_region
      %739 = dma.done [#allocation13], 128
    $region77: #{tpu_custom_call.1} parent=1 // pred_fallthru
      _
    // Predicated region
    $region78: #{tpu_custom_call.1} parent=1 // pred_check
      _
    $region79: #{tpu_custom_call.1} parent=1 // pred_check_branch
      %741 = sbr.rel (0) target = $region81
    $region80: #{tpu_custom_call.1} parent=1 // pred_region
      %742 = dma.done [#allocation13], 1024
    $region81: #{tpu_custom_call.1} parent=1 // pred_fallthru
      _
    // Predicated region
    $region82: #{tpu_custom_call.1} parent=1 // pred_check
      _
    $region83: #{tpu_custom_call.1} parent=1 // pred_check_branch
      %744 = sbr.rel (0) target = $region85
    $region84: #{tpu_custom_call.1} parent=1 // pred_region
      %745 = dma.done [#allocation16], 1024
    $region85: #{tpu_custom_call.1} parent=1 // pred_fallthru
      _
    %746 = vsyncpa [#allocation4], 1
    %747 = vsyncpa [#allocation7], 1
    %748 = vsyncpa [#allocation10], 1
    %749 = vsyncpa [#allocation5], 1
    %750 = vsyncpa [#allocation13], 1
    %751 = vsyncpa [#allocation16], 1

</llo_original>
